<compile_context>
chip_gen: v5e
topology: v5e:2x2
jax: 0.10.0
libtpu: 0.0.40
codegen_flags: <defaults>
</compile_context>

<pallas_src>
import math

import jax
import jax.numpy as jnp
from jax.experimental import pallas as pl
from jax.experimental.pallas import tpu as pltpu

_MIB = 1024 * 1024


def _cdiv(a, b):
    return -(-a // b)


def _round_up(x, m):
    return _cdiv(x, m) * m


def _sublane(dtype):
    # Native sublane multiple per element width (f32: 8, bf16: 16, int8/fp8: 32).
    return {4: 8, 2: 16, 1: 32}.get(jnp.dtype(dtype).itemsize, 8)


# --------------------------------------------------------------------------
# Kernels
# --------------------------------------------------------------------------
def _residual_resident_kernel(scales_ref, x_ref, w_ref, b_ref, o_ref):
    # scales_ref: (2,) SMEM   x_ref: (tm, D)   w_ref: (D, D)   b_ref: (1, D)
    s0 = scales_ref[0]
    s1 = scales_ref[1]
    x = x_ref[...]
    y = jnp.dot(x, w_ref[...], preferred_element_type=jnp.float32)
    y = y + b_ref[...].astype(jnp.float32)
    o_ref[...] = (s0 * x.astype(jnp.float32) + s1 * y).astype(o_ref.dtype)


def _residual_ktiled_kernel(scales_ref, xk_ref, xfull_ref, w_ref, b_ref, o_ref, acc_ref):
    # Grid: (M blocks, K blocks); K is the reduction axis (last, "arbitrary").
    # xk_ref: (tm, tk)  xfull_ref: (tm, D)  w_ref: (tk, D)  acc_ref: (tm, D) f32
    k = pl.program_id(1)

    @pl.when(k == 0)
    def _():
        acc_ref[...] = jnp.zeros_like(acc_ref)

    acc_ref[...] += jnp.dot(xk_ref[...], w_ref[...],
                            preferred_element_type=jnp.float32)

    @pl.when(k == pl.num_programs(1) - 1)
    def _():
        s0 = scales_ref[0]
        s1 = scales_ref[1]
        o_ref[...] = (s0 * xfull_ref[...].astype(jnp.float32)
                      + s1 * (acc_ref[...] + b_ref[...].astype(jnp.float32))
                      ).astype(o_ref.dtype)


# --------------------------------------------------------------------------
# Tiling helpers
# --------------------------------------------------------------------------
def _choose_tm(M, sub, tm_cap_rows, tm_target_rows):
    tm = max(sub, min(tm_target_rows, tm_cap_rows))
    if M >= 2 * sub:
        # Keep >= 2 grid steps so a v7x megacore can shard the M axis.
        tm = min(tm, _round_up(_cdiv(M, 2), sub))
    if tm >= M:
        return M                      # single full-extent block (always legal)
    return max(sub, (tm // sub) * sub)  # sublane-aligned streaming tile


# --------------------------------------------------------------------------
# pallas_call wrappers
# --------------------------------------------------------------------------
def _resident_call(x2d, w, b2d, scales, M, d_model,
                   x_item, w_item, b_item, sub, w_bytes, vmem_budget_bytes):
    # Target ~2 MiB of x per step (amortize ~0.35us per-step overhead), >=512 rows.
    tm_target = _round_up(max(512, (2 * _MIB) // max(1, d_model * x_item)), sub)
    per_row = 2 * d_model * x_item + 2 * d_model * x_item     # x + out, double-buffered
    avail = vmem_budget_bytes - w_bytes - d_model * b_item
    tm_cap = max(sub, (max(avail, 0) // per_row) // sub * sub)
    tm = _choose_tm(M, sub, tm_cap, tm_target)
    grid_m = _cdiv(M, tm)

    needed = 4 * tm * d_model * x_item + w_bytes + d_model * b_item
    vmem_limit = max(32 * _MIB, min(int(needed * 1.25) + 2 * _MIB, 64 * _MIB))

    cost = pl.CostEstimate(
        flops=2 * M * d_model * d_model,
        transcendentals=0,
        bytes_accessed=2 * M * d_model * x_item + w_bytes + d_model * b_item,
    )

    return pl.pallas_call(
        _residual_resident_kernel,
        out_shape=jax.ShapeDtypeStruct((M, d_model), x2d.dtype),
        grid_spec=pltpu.PrefetchScalarGridSpec(
            num_scalar_prefetch=0,
            grid=(grid_m,),
            in_specs=[
                pl.BlockSpec(memory_space=pltpu.MemorySpace.SMEM),       # scales (SMEM)
                pl.BlockSpec((tm, d_model), lambda i: (i, 0)),           # x tile (streamed)
                pl.BlockSpec((d_model, d_model), lambda i: (0, 0),
                             pipeline_mode=pl.Buffered(1)),              # W (resident, 1 buf)
                pl.BlockSpec((1, d_model), lambda i: (0, 0),
                             pipeline_mode=pl.Buffered(1)),              # bias (resident, 1 buf)
            ],
            out_specs=pl.BlockSpec((tm, d_model), lambda i: (i, 0)),     # out tile (streamed)
        ),
        compiler_params=pltpu.CompilerParams(
            dimension_semantics=("parallel",),
            vmem_limit_bytes=vmem_limit,
        ),
        cost_estimate=cost,
    )(scales, x2d, w, b2d)


def _ktiled_call(x2d, w, b2d, scales, M, d_model,
                 x_item, w_item, b_item, sub, vmem_budget_bytes):
    tk = next(c for c in (512, 256, 128) if d_model % c == 0)
    grid_k = d_model // tk

    w_tile_bytes = 2 * tk * d_model * w_item          # W K-slabs, double-buffered
    per_row = (2 * tk * x_item                        # x K-tile, double-buffered
               + 2 * d_model * x_item                 # full x row block (residual term)
               + d_model * 4                          # f32 accumulator scratch
               + 2 * d_model * x_item)                # out, double-buffered
    avail = vmem_budget_bytes - w_tile_bytes - d_model * b_item
    tm_cap = max(sub, (max(avail, 0) // per_row) // sub * sub)
    tm = _choose_tm(M, sub, tm_cap, 1024)
    grid_m = _cdiv(M, tm)

    needed = (2 * tm * tk * x_item + 4 * tm * d_model * x_item
              + w_tile_bytes + tm * d_model * 4 + d_model * b_item)
    vmem_limit = max(32 * _MIB, min(int(needed * 1.25) + 2 * _MIB, 64 * _MIB))

    cost = pl.CostEstimate(
        flops=2 * M * d_model * d_model,
        transcendentals=0,
        bytes_accessed=(3 * M * d_model * x_item
                        + grid_m * d_model * d_model * w_item
                        + d_model * b_item),
    )

    return pl.pallas_call(
        _residual_ktiled_kernel,
        out_shape=jax.ShapeDtypeStruct((M, d_model), x2d.dtype),
        grid_spec=pltpu.PrefetchScalarGridSpec(
            num_scalar_prefetch=0,
            grid=(grid_m, grid_k),
            in_specs=[
                pl.BlockSpec(memory_space=pltpu.MemorySpace.SMEM),       # scales (SMEM)
                pl.BlockSpec((tm, tk), lambda i, k: (i, k)),             # x K-tile
                pl.BlockSpec((tm, d_model), lambda i, k: (i, 0)),        # x full rows (residual)
                pl.BlockSpec((tk, d_model), lambda i, k: (k, 0)),        # W K-slab (streamed)
                pl.BlockSpec((1, d_model), lambda i, k: (0, 0),
                             pipeline_mode=pl.Buffered(1)),              # bias (resident, 1 buf)
            ],
            out_specs=pl.BlockSpec((tm, d_model), lambda i, k: (i, 0)),  # accumulator output
            scratch_shapes=[pltpu.VMEM((tm, d_model), jnp.float32)],
        ),
        compiler_params=pltpu.CompilerParams(
            dimension_semantics=("parallel", "arbitrary"),
            vmem_limit_bytes=vmem_limit,
        ),
        cost_estimate=cost,
    )(scales, x2d, x2d, w, b2d)


# --------------------------------------------------------------------------
# Public entry point
# --------------------------------------------------------------------------
def residual_connection(emb, w, b, residual_scales=(1.0, 1.0), *,
                        max_resident_w_bytes=24 * _MIB,
                        vmem_budget_bytes=40 * _MIB):
    """Fused residual connection: s0 * emb + s1 * (emb @ w + b).

    emb: (batch, *, d_model)    w: (d_model, d_model)    b: (d_model,)
    """
    *lead, d_model = emb.shape
    M = math.prod(lead) if lead else 1
    assert w.shape == (d_model, d_model)
    assert b.shape[-1] == d_model

    # bf16/f16 activations: feed the MXU low-precision operands (native rate,
    # half the W footprint) while keeping f32 accumulation in the kernel.
    if jnp.issubdtype(emb.dtype, jnp.floating) and jnp.dtype(emb.dtype).itemsize < 4:
        if w.dtype != emb.dtype:
            w = w.astype(emb.dtype)

    x_item = jnp.dtype(emb.dtype).itemsize
    w_item = jnp.dtype(w.dtype).itemsize
    b_item = jnp.dtype(b.dtype).itemsize
    sub = _sublane(emb.dtype)

    x2d = emb.reshape(M, d_model)
    b2d = b.reshape(1, d_model)
    scales = jnp.asarray(residual_scales, dtype=jnp.float32).reshape(2)

    w_bytes = d_model * d_model * w_item
    # Resident-W fast path unless W blows the VMEM budget (v7x: 64 MiB/TC).
    # TODO(synk): pad/ragged-K handling so the K-tiled path also covers d_model
    # that is not a multiple of 128.
    if w_bytes <= max_resident_w_bytes or d_model % 128 != 0:
        out2d = _resident_call(x2d, w, b2d, scales, M, d_model,
                               x_item, w_item, b_item, sub,
                               w_bytes, vmem_budget_bytes)
    else:
        out2d = _ktiled_call(x2d, w, b2d, scales, M, d_model,
                             x_item, w_item, b_item, sub, vmem_budget_bytes)
    return out2d.reshape(emb.shape)


# --------------------------------------------------------------------------
# Reference + tests
# --------------------------------------------------------------------------
def _reference(emb, w, b, residual_scales):
    s0, s1 = residual_scales
    y = jnp.einsum("...d,de->...e", emb.astype(jnp.float32), w.astype(jnp.float32),
                   precision=jax.lax.Precision.HIGHEST)
    return s0 * emb.astype(jnp.float32) + s1 * (y + b.astype(jnp.float32))


if __name__ == "__main__":
    key = jax.random.PRNGKey(0)
    k_emb, k_w, k_b, k_emb2, k_w2, k_b2, k_emb3 = jax.random.split(key, 7)

    residual_scales = (0.7, 1.3)

    # 1) f32 (batch, seq, d_model) = (2, 8, 128) -- resident-W fast path.
    batch, seq, d_model = 2, 8, 128
    emb = jax.random.normal(k_emb, (batch, seq, d_model), dtype=jnp.float32)
    w = jax.random.normal(k_w, (d_model, d_model), dtype=jnp.float32) * 0.02
    b = jax.random.normal(k_b, (d_model,), dtype=jnp.float32) * 0.01

    out = jax.block_until_ready(residual_connection(emb, w, b, residual_scales))
    assert out.shape == emb.shape
    assert jnp.allclose(out, _reference(emb, w, b, residual_scales), atol=1e-3, rtol=1e-3)

    # 2) Ragged M (3*5 = 15 rows): partial block handled by Pallas masked writes
    #    (no host-side pad/slice copies).
    emb2 = jax.random.normal(k_emb2, (3, 5, d_model), dtype=jnp.float32)
    out2 = jax.block_until_ready(residual_connection(emb2, w, b, residual_scales))
    assert out2.shape == emb2.shape
    assert jnp.allclose(out2, _reference(emb2, w, b, residual_scales), atol=1e-3, rtol=1e-3)

    # 3) bf16 activations: W fed to the MXU in bf16, f32 accumulation/combine.
    emb_bf = emb.astype(jnp.bfloat16)
    out_bf = jax.block_until_ready(residual_connection(emb_bf, w, b, residual_scales))
    assert out_bf.dtype == jnp.bfloat16 and out_bf.shape == emb.shape
    ref_bf = _reference(emb_bf, w.astype(jnp.bfloat16), b, residual_scales)
    assert jnp.allclose(out_bf.astype(jnp.float32), ref_bf, atol=5e-2, rtol=5e-2)

    # 4) Forced K-tiled accumulator path (what very large d_model uses on v7x).
    d2 = 384
    emb3 = jax.random.normal(k_emb3, (2, 32, d2), dtype=jnp.float32)
    w2 = jax.random.normal(k_w2, (d2, d2), dtype=jnp.float32) * 0.02
    b2 = jax.random.normal(k_b2, (d2,), dtype=jnp.float32) * 0.01
    out3 = jax.block_until_ready(
        residual_connection(emb3, w2, b2, residual_scales, max_resident_w_bytes=0))
    assert out3.shape == emb3.shape
    assert jnp.allclose(out3, _reference(emb3, w2, b2, residual_scales), atol=1e-3, rtol=1e-3)

    print("KERNEL_OK")
</pallas_src>

<mosaic_0001>
module attributes {stable_mosaic.version = 11 : i64} {
  func.func @_residual_resident_kernel(%arg0: i32, %arg1: memref<2xf32, #tpu.memory_space<smem>>, %arg2: memref<8x128xf32, #tpu.memory_space<vmem>>, %arg3: memref<128x128xf32, #tpu.memory_space<vmem>>, %arg4: memref<1x128xf32, #tpu.memory_space<vmem>>, %arg5: memref<8x128xf32, #tpu.memory_space<vmem>>) attributes {dimension_semantics = [#tpu.dimension_semantics<parallel>], iteration_bounds = array<i64: 2>, scalar_prefetch = 0 : i64, scratch_operands = 0 : i64, tpu.core_type = #tpu.core_type<tc>, window_params = [{transform_indices = @transform_0, window_bounds = array<i64: 2>}, {transform_indices = @transform_1, window_bounds = array<i64: 8, 128>}, {pipeline_mode = #tpu.pipeline_mode<synchronous>, transform_indices = @transform_2, window_bounds = array<i64: 128, 128>}, {pipeline_mode = #tpu.pipeline_mode<synchronous>, transform_indices = @transform_3, window_bounds = array<i64: 1, 128>}, {transform_indices = @transform_4, window_bounds = array<i64: 8, 128>}]} {
    %c0 = arith.constant 0 : index
    %0 = memref.load %arg1[%c0] : memref<2xf32, #tpu.memory_space<smem>>
    %c1 = arith.constant 1 : index
    %1 = memref.load %arg1[%c1] : memref<2xf32, #tpu.memory_space<smem>>
    %c0_0 = arith.constant 0 : index
    %c0_1 = arith.constant 0 : index
    %2 = vector.load %arg2[%c0_0, %c0_1] : memref<8x128xf32, #tpu.memory_space<vmem>>, vector<8x128xf32>
    %c0_2 = arith.constant 0 : index
    %c0_3 = arith.constant 0 : index
    %3 = vector.load %arg3[%c0_2, %c0_3] : memref<128x128xf32, #tpu.memory_space<vmem>>, vector<128x128xf32>
    %cst = arith.constant dense<0.000000e+00> : vector<8x128xf32>
    %4 = tpu.matmul %2, %3, %cst {dimension_numbers = #tpu.dot_dimension_numbers<[1], [0], [0], [1], [0, 0, 1, 1], [], []>} : vector<8x128xf32>, vector<128x128xf32>, vector<8x128xf32> -> vector<8x128xf32>
    %c0_4 = arith.constant 0 : index
    %c0_5 = arith.constant 0 : index
    %5 = vector.load %arg4[%c0_4, %c0_5] : memref<1x128xf32, #tpu.memory_space<vmem>>, vector<1x128xf32>
    %6 = vector.broadcast %5 : vector<1x128xf32> to vector<8x128xf32>
    %7 = arith.addf %4, %6 : vector<8x128xf32>
    %8 = vector.broadcast %0 : f32 to vector<8x128xf32>
    %9 = arith.mulf %8, %2 : vector<8x128xf32>
    %10 = vector.broadcast %1 : f32 to vector<8x128xf32>
    %11 = arith.mulf %10, %7 : vector<8x128xf32>
    %12 = arith.addf %9, %11 : vector<8x128xf32>
    %c0_6 = arith.constant 0 : index
    %c0_7 = arith.constant 0 : index
    %13 = vector.load %arg5[%c0_6, %c0_7] : memref<8x128xf32, #tpu.memory_space<vmem>>, vector<8x128xf32>
    tpu.vector_store %arg5[%c0_6, %c0_7], %12 {strides = array<i32>} : memref<8x128xf32, #tpu.memory_space<vmem>>, vector<8x128xf32>,
    return
  }
  func.func @transform_0(%arg0: i32) -> i32 {
    %c0_i32 = arith.constant 0 : i32
    %c0_i32_0 = arith.constant 0 : i32
    return %c0_i32 : i32
  }
  func.func @transform_1(%arg0: i32) -> (i32, i32) {
    %c0_i32 = arith.constant 0 : i32
    %c0_i32_0 = arith.constant 0 : i32
    return %arg0, %c0_i32 : i32, i32
  }
  func.func @transform_2(%arg0: i32) -> (i32, i32) {
    %c0_i32 = arith.constant 0 : i32
    %c0_i32_0 = arith.constant 0 : i32
    %c0_i32_1 = arith.constant 0 : i32
    return %c0_i32, %c0_i32_0 : i32, i32
  }
  func.func @transform_3(%arg0: i32) -> (i32, i32) {
    %c0_i32 = arith.constant 0 : i32
    %c0_i32_0 = arith.constant 0 : i32
    %c0_i32_1 = arith.constant 0 : i32
    return %c0_i32, %c0_i32_0 : i32, i32
  }
  func.func @transform_4(%arg0: i32) -> (i32, i32) {
    %c0_i32 = arith.constant 0 : i32
    %c0_i32_0 = arith.constant 0 : i32
    return %arg0, %c0_i32 : i32, i32
  }
}

</mosaic_0001>

<llo_original>
// kernel: tpu_custom_call.1
$region0: #{tpu_custom_call.1}
  #allocation0 [shape = 'u32[]', space=smem, size = 0x4, offset = 0x4, fixed_abs, tag = 'smem constant byte address 0x4 - core index']
  #allocation1 [shape = 'u32[72,128]{1,0:T(1,128)}', space=vmem, size = 0x9000, scoped, tag = 'internal scratch']
  %s0 = inlined_call_operand.hbm [shape: f32[2], index: 0, kind: input, shape index: {}]
  %s1 = inlined_call_operand.hbm [shape: f32[16,128], index: 1, kind: input, shape index: {}]
  %s2 = inlined_call_operand.hbm [shape: f32[128,128], index: 2, kind: input, shape index: {}]
  %s3 = inlined_call_operand.vmem [shape: f32[1,128], index: 3, kind: input, shape index: {}]
  %s4 = inlined_call_operand.hbm [shape: f32[16,128], index: 4, kind: output, shape index: {}]
  %s5 = sld [smem:[#allocation0]]
  $region61: #{tpu_custom_call.1} parent=0
    _
  %s7 = ssub.s32 1, %s5
  %s8 = scalar_select 0, %s7, %s5
  $region1: #{tpu_custom_call.1} parent=0
    #allocation2 [shape = 'u8[512]{0}', space=smem, size = 0x200, scoped, tag = 'input window, operand 0, single buffered']
    #allocation3 [shape = 's32[2]{0}', space=sflag, size = 0x8, scoped, tag = 'scoped memory for tpu_custom_call.1']
    #allocation4 [shape = 's32[2]{0}', space=sflag, size = 0x8, scoped, tag = 'scoped memory for tpu_custom_call.1']
    #allocation5 [shape = 's32[2]{0}', space=sflag, size = 0x8, scoped, tag = 'scoped memory for tpu_custom_call.1']
    #allocation6 [shape = 'u8[8192]{0}', space=vmem, size = 0x2000, scoped, tag = 'input window, operand 1']
    #allocation7 [shape = 'u8[65536]{0}', space=vmem, size = 0x10000, scoped, tag = 'input window, operand 2, single buffered']
    #allocation8 [shape = 's32[1]{0}', space=sflag, size = 0x4, scoped, tag = 'scoped memory for tpu_custom_call.1']
    #allocation9 [shape = 'u8[8192]{0}', space=vmem, size = 0x2000, scoped, tag = 'output window, operand 0']
    %9 = vsyncpa [#allocation5], 0
    %10 = vsyncpa [#allocation3], 0
    %s11 = scalar_lea.sflag [#allocation3], 1
    %12 = vsyncpa %s11, 0
    %13 = vsyncpa [#allocation8], 0
    %14 = vsyncpa [#allocation4], 0
    %s15 = scalar_lea.sflag [#allocation4], 1
    %16 = vsyncpa %s15, 0
    loop: start=0, step=1, limit=4
    $region2: #{tpu_custom_call.1} parent=1 // loop_pre_header
      _
    $region3: #{tpu_custom_call.1} parent=1 // loop_header
      %s18 = sphi 0, %s22
      %p19 = scmp.ge.s32.totalorder %s18, 4
      %s26 = sphi 0, %s26
      %s28 = sphi 0, %s26
      %s29 = sphi 0, %s28
      %s43 = sphi 0, %s29
      %s49 = sphi 0, %s51
      %s52 = sphi 0, %s49
      %s53 = sphi 0, %s52
      %s69 = sphi 0, %s53
      %s73 = sphi 0, %s73
      %s75 = sphi 0, %s73
      %s76 = sphi 0, %s75
      %s90 = sphi 0, %s76
      %s94 = sphi 0, %s94
      %s96 = sphi 0, %s94
      %s97 = sphi 0, %s96
      %s111 = sphi 0, %s97
      %s117 = sphi 0, %s119
      %s120 = sphi 0, %s117
      %s121 = sphi 0, %s120
      %s137 = sphi 0, %s121
    $region4: #{tpu_custom_call.1} parent=1 // loop_header_branch
      %21 = sbr.rel (%p19) target = $region8
    $region5: #{tpu_custom_call.1} parent=1 // loop_body
      %s23 = ssub.s32 %s18, 1
      %s24 = ssub.s32 %s18, 2
      %s25 = sadd.s32 %s18, 1
      %s27 = sadd.s32 %s26, 1
      %p30 = scmp.eq.s32.totalorder %s18, 1
      %p31 = scmp.ne.s32.totalorder %s26, %s28
      %p32 = scmp.eq.s32.totalorder %s18, 0
      %p33 = por %p31, %p32
      %p34 = scmp.ne.s32.totalorder %s26, %s28
      %p35 = scmp.eq.s32.totalorder %s23, 1
      %p36 = por %p34, %p35
      %p37 = scmp.ne.s32.totalorder %s28, %s29
      %p38 = scmp.eq.s32.totalorder %s23, 0
      %p39 = por %p37, %p38
      %p40 = scmp.ne.s32.totalorder %s28, %s29
      %p41 = scmp.eq.s32.totalorder %s24, 1
      %p42 = por %p40, %p41
      %p44 = scmp.ne.s32.totalorder %s29, %s43
      %p45 = scmp.eq.s32.totalorder %s24, 0
      %p46 = por %p44, %p45
      %s47 = ssub.s32 %s18, %s25
      %p48 = scmp.eq.s32.totalorder %s47, 0
      %s50 = sadd.s32 %s49, 1
      %s51 = scalar_select %p48, %s49, %s50
      %p54 = pneg %p48
      %p55 = scmp.eq.s32.totalorder %s18, 1
      %p56 = por %p54, %p55
      %p57 = scmp.ne.s32.totalorder %s49, %s52
      %p58 = scmp.eq.s32.totalorder %s18, 0
      %p59 = por %p57, %p58
      %p60 = scmp.ne.s32.totalorder %s49, %s52
      %p61 = scmp.eq.s32.totalorder %s23, 1
      %p62 = por %p60, %p61
      %p63 = scmp.ne.s32.totalorder %s52, %s53
      %p64 = scmp.eq.s32.totalorder %s23, 0
      %p65 = por %p63, %p64
      %p66 = scmp.ne.s32.totalorder %s52, %s53
      %p67 = scmp.eq.s32.totalorder %s24, 1
      %p68 = por %p66, %p67
      %p70 = scmp.ne.s32.totalorder %s53, %s69
      %p71 = scmp.eq.s32.totalorder %s24, 0
      %p72 = por %p70, %p71
      %s74 = sadd.s32 %s73, 1
      %p77 = scmp.eq.s32.totalorder %s18, 1
      %p78 = scmp.ne.s32.totalorder %s73, %s75
      %p79 = scmp.eq.s32.totalorder %s18, 0
      %p80 = por %p78, %p79
      %p81 = scmp.ne.s32.totalorder %s73, %s75
      %p82 = scmp.eq.s32.totalorder %s23, 1
      %p83 = por %p81, %p82
      %p84 = scmp.ne.s32.totalorder %s75, %s76
      %p85 = scmp.eq.s32.totalorder %s23, 0
      %p86 = por %p84, %p85
      %p87 = scmp.ne.s32.totalorder %s75, %s76
      %p88 = scmp.eq.s32.totalorder %s24, 1
      %p89 = por %p87, %p88
      %p91 = scmp.ne.s32.totalorder %s76, %s90
      %p92 = scmp.eq.s32.totalorder %s24, 0
      %p93 = por %p91, %p92
      %s95 = sadd.s32 %s94, 1
      %p98 = scmp.eq.s32.totalorder %s18, 1
      %p99 = scmp.ne.s32.totalorder %s94, %s96
      %p100 = scmp.eq.s32.totalorder %s18, 0
      %p101 = por %p99, %p100
      %p102 = scmp.ne.s32.totalorder %s94, %s96
      %p103 = scmp.eq.s32.totalorder %s23, 1
      %p104 = por %p102, %p103
      %p105 = scmp.ne.s32.totalorder %s96, %s97
      %p106 = scmp.eq.s32.totalorder %s23, 0
      %p107 = por %p105, %p106
      %p108 = scmp.ne.s32.totalorder %s96, %s97
      %p109 = scmp.eq.s32.totalorder %s24, 1
      %p110 = por %p108, %p109
      %p112 = scmp.ne.s32.totalorder %s97, %s111
      %p113 = scmp.eq.s32.totalorder %s24, 0
      %p114 = por %p112, %p113
      %s115 = ssub.s32 %s18, %s25
      %p116 = scmp.eq.s32.totalorder %s115, 0
      %s118 = sadd.s32 %s117, 1
      %s119 = scalar_select %p116, %s117, %s118
      %p122 = pneg %p116
      %p123 = scmp.eq.s32.totalorder %s18, 1
      %p124 = por %p122, %p123
      %p125 = scmp.ne.s32.totalorder %s117, %s120
      %p126 = scmp.eq.s32.totalorder %s18, 0
      %p127 = por %p125, %p126
      %p128 = scmp.ne.s32.totalorder %s117, %s120
      %p129 = scmp.eq.s32.totalorder %s23, 1
      %p130 = por %p128, %p129
      %p131 = scmp.ne.s32.totalorder %s120, %s121
      %p132 = scmp.eq.s32.totalorder %s23, 0
      %p133 = por %p131, %p132
      %p134 = scmp.ne.s32.totalorder %s120, %s121
      %p135 = scmp.eq.s32.totalorder %s24, 1
      %p136 = por %p134, %p135
      %p138 = scmp.ne.s32.totalorder %s121, %s137
      %p139 = scmp.eq.s32.totalorder %s24, 0
      %p140 = por %p138, %p139
      %p141 = scmp.le.s32.totalorder 1, %s18
      %p142 = scmp.lt.s32.totalorder %s18, 3
      %p143 = pnand %p141, %p142
      %p144 = pneg %p143
      // Predicated region
      $region9: #{tpu_custom_call.1} parent=5 // pred_check
        _
      $region10: #{tpu_custom_call.1} parent=5 // pred_check_branch
        %146 = sbr.rel (%p143) target = $region12
      $region11: #{tpu_custom_call.1} parent=5 // pred_region
        %s147 = ssub.s32 %s18, 1
        // Predicated region
        $region13: #{tpu_custom_call.1} parent=11 // pred_check
          %p148 = pneg %p39
        $region14: #{tpu_custom_call.1} parent=11 // pred_check_branch
          %150 = sbr.rel (%p148) target = $region16
        $region15: #{tpu_custom_call.1} parent=11 // pred_region
          %152 = vsyncadd [#allocation5], 0
          %s154 = sshll.u32 %s0, 4
          %s155 = int_to_ptr.hbm [resolvable:$true] %s154
          %157 = dma.hbm_to_smem %s155, 16, [#allocation2], [#allocation5]
        $region16: #{tpu_custom_call.1} parent=11 // pred_fallthru
          _
        // Predicated region
        $region17: #{tpu_custom_call.1} parent=11 // pred_check
          %p158 = pneg %p86
        $region18: #{tpu_custom_call.1} parent=11 // pred_check_branch
          %160 = sbr.rel (%p158) target = $region20
        $region19: #{tpu_custom_call.1} parent=11 // pred_region
          %162 = vsyncadd [#allocation8], 0
          %s163 = sshll.u32 %s2, 4
          %s164 = int_to_ptr.hbm [resolvable:$true] %s163
          %s165 = sshll.u32 [#allocation7], 4
          %s166 = int_to_ptr.vmem [resolvable:$true] %s165
          %171 = dma.hbm_to_vmem [thread:$0]  %s164, 2048, %s166, [#allocation8], 128, 128, 8
        $region20: #{tpu_custom_call.1} parent=11 // pred_fallthru
          _
        // Predicated region
        $region21: #{tpu_custom_call.1} parent=11 // pred_check
          %p172 = pneg %p107
        $region22: #{tpu_custom_call.1} parent=11 // pred_check_branch
          %174 = sbr.rel (%p172) target = $region24
        $region23: #{tpu_custom_call.1} parent=11 // pred_region
          _
        $region24: #{tpu_custom_call.1} parent=11 // pred_fallthru
          _
      $region12: #{tpu_custom_call.1} parent=5 // pred_fallthru
        _
      %p175 = scmp.lt.s32.totalorder %s18, 2
      // Predicated region
      $region25: #{tpu_custom_call.1} parent=5 // pred_check
        %p176 = pneg %p175
      $region26: #{tpu_custom_call.1} parent=5 // pred_check_branch
        %178 = sbr.rel (%p176) target = $region28
      $region27: #{tpu_custom_call.1} parent=5 // pred_region
        // Predicated region
        $region29: #{tpu_custom_call.1} parent=27 // pred_check
          %p179 = pneg %p59
        $region30: #{tpu_custom_call.1} parent=27 // pred_check_branch
          %181 = sbr.rel (%p179) target = $region32
        $region31: #{tpu_custom_call.1} parent=27 // pred_region
          %s182 = sand.u32 %s49, 1
          %s183 = scalar_lea.sflag [#allocation3], %s182
          %s184 = sand.u32 %s49, 1
          %s185 = smul.addr %s184, 8
          %s186 = scalar_lea.vmem [#allocation6], %s185
          %188 = vsyncadd %s183, 0
          %s189 = smul.addr %s18, 8
          %s190 = scalar_lea.hbm %s1, %s189
          %s192 = sshll.u32 %s190, 4
          %s193 = int_to_ptr.hbm [resolvable:$true] %s192
          %s194 = sshll.u32 %s186, 4
          %s195 = int_to_ptr.vmem [resolvable:$true] %s194
          %197 = dma.hbm_to_vmem [thread:$0]  %s193, 128, %s195, %s183
        $region32: #{tpu_custom_call.1} parent=27 // pred_fallthru
          _
      $region28: #{tpu_custom_call.1} parent=5 // pred_fallthru
        _
      %p198 = scmp.le.s32.totalorder 1, %s18
      %p199 = scmp.lt.s32.totalorder %s18, 3
      %p200 = pnand %p198, %p199
      %p201 = pneg %p200
      // Predicated region
      $region33: #{tpu_custom_call.1} parent=5 // pred_check
        _
      $region34: #{tpu_custom_call.1} parent=5 // pred_check_branch
        %203 = sbr.rel (%p200) target = $region36
      $region35: #{tpu_custom_call.1} parent=5 // pred_region
        %s204 = ssub.s32 %s18, 1
        // Predicated region
        $region37: #{tpu_custom_call.1} parent=35 // pred_check
          %p205 = pneg %p39
        $region38: #{tpu_custom_call.1} parent=35 // pred_check_branch
          %207 = sbr.rel (%p205) target = $region40
        $region39: #{tpu_custom_call.1} parent=35 // pred_region
          %209 = dma.done [#allocation5], 16
        $region40: #{tpu_custom_call.1} parent=35 // pred_fallthru
          _
        %s210 = sand.u32 %s52, 1
        %s211 = scalar_lea.sflag [#allocation3], %s210
        %s212 = sand.u32 %s52, 1
        %s213 = smul.addr %s212, 8
        %s214 = scalar_lea.vmem [#allocation6], %s213
        // Predicated region
        $region41: #{tpu_custom_call.1} parent=35 // pred_check
          %p215 = pneg %p65
        $region42: #{tpu_custom_call.1} parent=35 // pred_check_branch
          %217 = sbr.rel (%p215) target = $region44
        $region43: #{tpu_custom_call.1} parent=35 // pred_region
          %219 = dma.done %s211, 128
        $region44: #{tpu_custom_call.1} parent=35 // pred_fallthru
          _
        // Predicated region
        $region45: #{tpu_custom_call.1} parent=35 // pred_check
          %p220 = pneg %p86
        $region46: #{tpu_custom_call.1} parent=35 // pred_check_branch
          %222 = sbr.rel (%p220) target = $region48
        $region47: #{tpu_custom_call.1} parent=35 // pred_region
          %224 = dma.done [#allocation8], 2048
        $region48: #{tpu_custom_call.1} parent=35 // pred_fallthru
          _
        %225 = sfence
        %p226 = pneg %p39
        %p227 = pneg %p36
        %s228 = sand.u32 %s52, 1
        %s229 = scalar_lea.sflag [#allocation3], %s228
        %s230 = sand.u32 %s52, 1
        %s231 = smul.addr %s230, 8
        %s232 = scalar_lea.vmem [#allocation6], %s231
        %p233 = pneg %p65
        %p234 = pneg %p62
        %p235 = pneg %p86
        %p236 = pneg %p83
        %p237 = pneg %p107
        %p238 = pneg %p104
        %p239 = pneg %p133
        %p240 = pneg %p130
        %s241 = sand.u32 %s120, 1
        %s242 = scalar_lea.sflag [#allocation4], %s241
        %s243 = sand.u32 %s120, 1
        %s244 = smul.addr %s243, 8
        %s245 = scalar_lea.vmem [#allocation9], %s244
        %s246 = sld [smem:[#allocation2]]
        %s247 = sld [smem:[#allocation2 + $0x1]]
        %v248 = vld [vmem:[%s214] sm:$0xff]
        %v249 = vld [vmem:[#allocation7] sm:$0xff]
        %v250 = vld [vmem:[#allocation7 + $0x8] sm:$0xff]
        %v251 = vld [vmem:[#allocation7 + $0x10] sm:$0xff]
        %v252 = vld [vmem:[#allocation7 + $0x18] sm:$0xff]
        %v253 = vld [vmem:[#allocation7 + $0x20] sm:$0xff]
        %v254 = vld [vmem:[#allocation7 + $0x28] sm:$0xff]
        %v255 = vld [vmem:[#allocation7 + $0x30] sm:$0xff]
        %v256 = vld [vmem:[#allocation7 + $0x38] sm:$0xff]
        %v257 = vld [vmem:[#allocation7 + $0x40] sm:$0xff]
        %v258 = vld [vmem:[#allocation7 + $0x48] sm:$0xff]
        %v259 = vld [vmem:[#allocation7 + $0x50] sm:$0xff]
        %v260 = vld [vmem:[#allocation7 + $0x58] sm:$0xff]
        %v261 = vld [vmem:[#allocation7 + $0x60] sm:$0xff]
        %v262 = vld [vmem:[#allocation7 + $0x68] sm:$0xff]
        %v263 = vld [vmem:[#allocation7 + $0x70] sm:$0xff]
        %v264 = vld [vmem:[#allocation7 + $0x78] sm:$0xff]
        %v265 = vld [vmem:[%s3] sm:$0x1]
        %v267 = vperm.slane %v265, 0
        %269 = vmatpush.msra.mxu0 %v264
        %270 = vmatpush.msra.mxu0 %v263
        %271 = vmatpush.msra.mxu0 %v262
        %272 = vmatpush.msra.mxu0 %v261
        %273 = vmatpush.msra.mxu0 %v260
        %274 = vmatpush.msra.mxu0 %v259
        %275 = vmatpush.msra.mxu0 %v258
        %276 = vmatpush.msra.mxu0 %v257
        %277 = vmatpush.msra.mxu0 %v256
        %278 = vmatpush.msra.mxu0 %v255
        %279 = vmatpush.msra.mxu0 %v254
        %280 = vmatpush.msra.mxu0 %v253
        %281 = vmatpush.msra.mxu0 %v252
        %282 = vmatpush.msra.mxu0 %v251
        %283 = vmatpush.msra.mxu0 %v250
        %284 = vmatpush.msra.mxu0 %v249
        %285 = vmatmul.f32.gmra.mxu0 %v248
        %v286 = vpop.f32.mrf.mxu0
        %v287 = vadd.f32 %v267, %v286
        %288 = vdwg.mxu0
        %v289 = vstv %s246
        %v290 = vmul.f32 %v289, %v248
        %v291 = vstv %s247
        %v292 = vmul.f32 %v291, %v287
        %v293 = vadd.f32 %v290, %v292
        %294 = vst [vmem:[%s245] sm:$0xff] %v293
        %s295 = sand.u32 %s120, 1
        %s296 = scalar_lea.sflag [#allocation4], %s295
        %s297 = sand.u32 %s120, 1
        %s298 = smul.addr %s297, 8
        %s299 = scalar_lea.vmem [#allocation9], %s298
        // Predicated region
        $region49: #{tpu_custom_call.1} parent=35 // pred_check
          %p300 = pneg %p130
        $region50: #{tpu_custom_call.1} parent=35 // pred_check_branch
          %302 = sbr.rel (%p300) target = $region52
        $region51: #{tpu_custom_call.1} parent=35 // pred_region
          %304 = vsyncadd %s296, 0
          %s305 = smul.addr %s23, 8
          %s306 = scalar_lea.hbm %s4, %s305
          %s308 = sshll.u32 %s299, 4
          %s309 = int_to_ptr.vmem [resolvable:$true] %s308
          %s310 = sshll.u32 %s306, 4
          %s311 = int_to_ptr.hbm [resolvable:$true] %s310
          %313 = dma.vmem_to_hbm [thread:$0]  %s309, 128, %s311, %s296
        $region52: #{tpu_custom_call.1} parent=35 // pred_fallthru
          _
      $region36: #{tpu_custom_call.1} parent=5 // pred_fallthru
        _
      %p314 = scmp.le.s32.totalorder 2, %s18
      // Predicated region
      $region53: #{tpu_custom_call.1} parent=5 // pred_check
        %p315 = pneg %p314
      $region54: #{tpu_custom_call.1} parent=5 // pred_check_branch
        %317 = sbr.rel (%p315) target = $region56
      $region55: #{tpu_custom_call.1} parent=5 // pred_region
        %s318 = ssub.s32 %s18, 2
        // Predicated region
        $region57: #{tpu_custom_call.1} parent=55 // pred_check
          %p319 = pneg %p136
        $region58: #{tpu_custom_call.1} parent=55 // pred_check_branch
          %321 = sbr.rel (%p319) target = $region60
        $region59: #{tpu_custom_call.1} parent=55 // pred_region
          %s322 = sand.u32 %s121, 1
          %s323 = scalar_lea.sflag [#allocation4], %s322
          %s324 = sand.u32 %s121, 1
          %s325 = smul.addr %s324, 8
          %s326 = scalar_lea.vmem [#allocation9], %s325
          %328 = dma.done %s323, 128
        $region60: #{tpu_custom_call.1} parent=55 // pred_fallthru
          _
      $region56: #{tpu_custom_call.1} parent=5 // pred_fallthru
        _
    $region6: #{tpu_custom_call.1} parent=1 // loop_footer
      %s22 = sadd.s32 1, %s18
    $region7: #{tpu_custom_call.1} parent=1 // loop_footer_branch
      %17 = sbr.rel target = $region3
    $region8: #{tpu_custom_call.1} parent=1 // loop_exit
      _
    %329 = vsyncpa [#allocation3], 1
    %s330 = scalar_lea.sflag [#allocation3], 1
    %331 = vsyncpa %s330, 1
    %332 = vsyncpa [#allocation8], 1
    %333 = vsyncpa [#allocation4], 1
    %s334 = scalar_lea.sflag [#allocation4], 1
    %335 = vsyncpa %s334, 1
    %336 = vsyncpa [#allocation5], 1
    %s337 = scalar_lea.sflag [#allocation5], 1
    %338 = vsyncpa %s337, 1

</llo_original>
